<compile_context>
chip_gen: v6e
topology: v6e:2x2x1
jax: 0.10.0
libtpu: 0.0.40
codegen_flags: <defaults>
</compile_context>

<pallas_src>
import functools

import jax
import jax.numpy as jnp
from jax.experimental import pallas as pl
from jax.experimental.pallas import tpu as pltpu


# ----------------------------------------------------------------- config --
def _vmem_limit_bytes():
    # Generation-aware scoped-VMEM budget: half of physical VMEM, clamped to
    # [32 MiB, 64 MiB]  (v5e/v6e: 128 MiB -> 64 MiB; v7x: 64 MiB -> 32 MiB).
    try:
        cap = int(pltpu.get_tpu_info().vmem_capacity_bytes)
    except Exception:
        cap = 128 * 1024 * 1024
    return max(32 * 1024 * 1024, min(cap // 2, 64 * 1024 * 1024))


_VMEM_LIMIT = _vmem_limit_bytes()
_PAD = 128  # node count is padded to a multiple of this


def _pick_tile(n, pref=512):
    """Largest of (512, 256, 128) <= pref dividing n, else n (n < 128 only)."""
    for t in (512, 256, 128):
        if t <= pref and t <= n and n % t == 0:
            return t
    return n


def _cparams(sem):
    return pltpu.CompilerParams(dimension_semantics=sem,
                                vmem_limit_bytes=_VMEM_LIMIT)


# ---------------------------------------------------------------- kernels --
def _mlp_heads_kernel(x_ref, w1_ref, b1_ref, w2_ref, b2_ref, o_ref):
    # All curvature MLPs batched: sigmoid(relu(x@W1cat + b1cat) @ W2blkdiag + b2cat)
    h = jnp.dot(x_ref[...], w1_ref[...], preferred_element_type=jnp.float32)
    h = jnp.maximum(h + b1_ref[...], 0.0)
    z = jnp.dot(h, w2_ref[...], preferred_element_type=jnp.float32) + b2_ref[...]
    o_ref[...] = jax.nn.sigmoid(z)


def _loss_pass1_kernel(adj_ref, wts_ref, mcol_ref, mrow_ref, gam_ref, dlf_ref):
    # Pass 1 over (i, j) tiles of the (N, N) graph:
    #   w          = adj * sigmoid(weights)     (recomputed per tile, not stored)
    #   gamma[i]  += 0.5 * sum_j w_ij (f_j - f_i)^2
    #   delta_f[i]+=       sum_j w_ij (f_j - f_i)
    j = pl.program_id(1)
    nf = gam_ref.shape[1]

    w = adj_ref[...] * jax.nn.sigmoid(wts_ref[...])

    @pl.when(j == 0)
    def _init():
        gam_ref[...] = jnp.zeros_like(gam_ref)
        dlf_ref[...] = jnp.zeros_like(dlf_ref)

    gcols, dcols = [], []
    for k in range(nf):                       # static unroll over fn heads
        f_i = mcol_ref[:, 1 + k:2 + k]        # (tm, 1)  f[i]  (column form)
        f_j = mrow_ref[1 + k:2 + k, :]        # (1, tn)  f[j]  (row form)
        fd = f_j - f_i                        # (tm, tn)
        wfd = w * fd                          # reused for gamma and delta_f
        gcols.append(0.5 * jnp.sum(wfd * fd, axis=1, keepdims=True))
        dcols.append(jnp.sum(wfd, axis=1, keepdims=True))
    gam_ref[...] += jnp.concatenate(gcols, axis=1)
    dlf_ref[...] += jnp.concatenate(dcols, axis=1)


def _loss_pass2_kernel(adj_ref, wts_ref, mcol_ref, mrow_ref, gcol_ref, grow_ref,
                       dcol_ref, drow_ref, g2_ref):
    # Pass 2:
    #   gamma2[i] = sum_j 0.5*w_ij*[(gamma_j - gamma_i) - (f_j - f_i)(df_j - df_i)]
    j = pl.program_id(1)
    nf = gcol_ref.shape[1]

    w = adj_ref[...] * jax.nn.sigmoid(wts_ref[...])

    @pl.when(j == 0)
    def _init():
        g2_ref[...] = jnp.zeros_like(g2_ref)

    cols = []
    for k in range(nf):
        f_i = mcol_ref[:, 1 + k:2 + k]
        f_j = mrow_ref[1 + k:2 + k, :]
        g_i = gcol_ref[:, k:k + 1]
        g_j = grow_ref[k:k + 1, :]
        d_i = dcol_ref[:, k:k + 1]
        d_j = drow_ref[k:k + 1, :]
        term = w * ((g_j - g_i) - (f_j - f_i) * (d_j - d_i))
        cols.append(0.5 * jnp.sum(term, axis=1, keepdims=True))
    g2_ref[...] += jnp.concatenate(cols, axis=1)


def _relu_loss_kernel(kap_ref, valid_ref, gcol_ref, g2col_ref, loss_ref):
    # loss_b = sum_heads sum_a valid_a * relu(kappa[a]*gamma[b] - gamma2[b])
    # Grid: (b row-blocks [parallel], a column-blocks [reduction]).
    j = pl.program_id(1)
    nf = gcol_ref.shape[1]

    @pl.when(j == 0)
    def _init():
        loss_ref[...] = jnp.zeros_like(loss_ref)

    kap = kap_ref[...]                        # (1, ta) kappa[a]
    val = valid_ref[...]                      # (1, ta) 1 for real nodes
    total = jnp.zeros(loss_ref.shape, loss_ref.dtype)
    for k in range(nf):
        g_b = gcol_ref[:, k:k + 1]            # (tb, 1)
        g2_b = g2col_ref[:, k:k + 1]          # (tb, 1)
        diff = jnp.maximum(g_b * kap - g2_b, 0.0)      # (tb, ta)
        total = total + jnp.sum(val * diff, axis=1, keepdims=True)
    loss_ref[...] += total


def _deg_all_kernel(abin_ref, mstk_ref, deg_ref):
    # Neighbour degrees for every SGC iteration in one adjacency sweep:
    #   deg_all[:, t] = Abin^T @ mask_t     (bf16 0/1 operands, exact f32 counts)
    i = pl.program_id(1)

    @pl.when(i == 0)
    def _init():
        deg_ref[...] = jnp.zeros_like(deg_ref)

    deg_ref[...] += jnp.dot(abin_ref[...], mstk_ref[...],
                            preferred_element_type=jnp.float32)


def _linear_scale_kernel(h_ref, w_ref, dis_ref, mask_ref, y_ref, ym_ref):
    # Per SGC layer: y = deg^-1/2 * (h @ W); y_masked = mask * y (bf16 operand
    # for the propagation matmul).
    y = dis_ref[...] * jnp.dot(h_ref[...], w_ref[...],
                               preferred_element_type=jnp.float32)
    y_ref[...] = y
    ym_ref[...] = (mask_ref[...] * y).astype(jnp.bfloat16)


def _sgc_prop_kernel(abin_ref, ym_ref, mask_ref, y_ref, dis_ref, b_ref,
                     o_ref, acc_ref, *, last_layer):
    # out = dis * ( mask * (Abin^T @ (mask*y)) + y ) + b
    # (self-loops handled by the +y term, masks folded into vectors -> the
    #  adjacency tile goes straight to the MXU).  Last layer fuses log_softmax.
    i = pl.program_id(1)
    ni = pl.num_programs(1)

    @pl.when(i == 0)
    def _init():
        acc_ref[...] = jnp.zeros_like(acc_ref)

    acc_ref[...] += jnp.dot(abin_ref[...], ym_ref[...],
                            preferred_element_type=jnp.float32)

    @pl.when(i == ni - 1)
    def _epilogue():
        out = dis_ref[...] * (mask_ref[...] * acc_ref[...] + y_ref[...]) + b_ref[...]
        if last_layer:
            out = out - jnp.max(out, axis=-1, keepdims=True)
            out = out - jnp.log(jnp.sum(jnp.exp(out), axis=-1, keepdims=True))
        o_ref[...] = out


# --------------------------------------------------------------- wrappers --
def batched_curv_mlp(x, w1, b1, w2, b2):
    n, nfeat = x.shape
    nheads = w2.shape[1]
    tm = _pick_tile(n)
    return pl.pallas_call(
        _mlp_heads_kernel,
        out_shape=jax.ShapeDtypeStruct((n, nheads), jnp.float32),
        grid_spec=pltpu.PrefetchScalarGridSpec(
            num_scalar_prefetch=0,
            grid=(n // tm,),
            in_specs=[
                pl.BlockSpec((tm, nfeat), lambda i: (i, 0)),
                pl.BlockSpec(w1.shape, lambda i: (0, 0)),
                pl.BlockSpec(b1.shape, lambda i: (0, 0)),
                pl.BlockSpec(w2.shape, lambda i: (0, 0)),
                pl.BlockSpec(b2.shape, lambda i: (0, 0)),
            ],
            out_specs=pl.BlockSpec((tm, nheads), lambda i: (i, 0)),
        ),
        compiler_params=_cparams(("parallel",)),
    )(x, w1, b1, w2, b2)


def loss_pass1(adj, weights, m_col, m_row, nf):
    n = adj.shape[0]
    hh = m_col.shape[1]
    tm = _pick_tile(n)
    tn = _pick_tile(n)
    return pl.pallas_call(
        _loss_pass1_kernel,
        out_shape=(jax.ShapeDtypeStruct((n, nf), jnp.float32),    # gamma
                   jax.ShapeDtypeStruct((n, nf), jnp.float32)),   # delta_f
        grid_spec=pltpu.PrefetchScalarGridSpec(
            num_scalar_prefetch=0,
            grid=(n // tm, n // tn),
            in_specs=[
                pl.BlockSpec((tm, tn), lambda i, j: (i, j)),
                pl.BlockSpec((tm, tn), lambda i, j: (i, j)),
                pl.BlockSpec((tm, hh), lambda i, j: (i, 0)),
                pl.BlockSpec((hh, tn), lambda i, j: (0, j)),
            ],
            out_specs=(pl.BlockSpec((tm, nf), lambda i, j: (i, 0)),
                       pl.BlockSpec((tm, nf), lambda i, j: (i, 0))),
        ),
        compiler_params=_cparams(("parallel", "arbitrary")),
    )(adj, weights, m_col, m_row)


def loss_pass2(adj, weights, m_col, m_row, g_col, g_row, d_col, d_row):
    n = adj.shape[0]
    hh = m_col.shape[1]
    nf = g_col.shape[1]
    tm = _pick_tile(n)
    tn = _pick_tile(n)
    return pl.pallas_call(
        _loss_pass2_kernel,
        out_shape=jax.ShapeDtypeStruct((n, nf), jnp.float32),     # gamma2
        grid_spec=pltpu.PrefetchScalarGridSpec(
            num_scalar_prefetch=0,
            grid=(n // tm, n // tn),
            in_specs=[
                pl.BlockSpec((tm, tn), lambda i, j: (i, j)),
                pl.BlockSpec((tm, tn), lambda i, j: (i, j)),
                pl.BlockSpec((tm, hh), lambda i, j: (i, 0)),
                pl.BlockSpec((hh, tn), lambda i, j: (0, j)),
                pl.BlockSpec((tm, nf), lambda i, j: (i, 0)),
                pl.BlockSpec((nf, tn), lambda i, j: (0, j)),
                pl.BlockSpec((tm, nf), lambda i, j: (i, 0)),
                pl.BlockSpec((nf, tn), lambda i, j: (0, j)),
            ],
            out_specs=pl.BlockSpec((tm, nf), lambda i, j: (i, 0)),
        ),
        compiler_params=_cparams(("parallel", "arbitrary")),
    )(adj, weights, m_col, m_row, g_col, g_row, d_col, d_row)


def relu_loss(kap_row, valid_row, gamma, gamma2):
    n, nf = gamma.shape
    tb = _pick_tile(n, pref=256)   # pure-VPU kernel: 256 keeps temporaries modest
    ta = _pick_tile(n, pref=256)
    return pl.pallas_call(
        _relu_loss_kernel,
        out_shape=jax.ShapeDtypeStruct((n, 1), jnp.float32),      # per-node partials
        grid_spec=pltpu.PrefetchScalarGridSpec(
            num_scalar_prefetch=0,
            grid=(n // tb, n // ta),
            in_specs=[
                pl.BlockSpec((1, ta), lambda i, j: (0, j)),
                pl.BlockSpec((1, ta), lambda i, j: (0, j)),
                pl.BlockSpec((tb, nf), lambda i, j: (i, 0)),
                pl.BlockSpec((tb, nf), lambda i, j: (i, 0)),
            ],
            out_specs=pl.BlockSpec((tb, 1), lambda i, j: (i, 0)),
        ),
        compiler_params=_cparams(("parallel", "arbitrary")),
    )(kap_row, valid_row, gamma, gamma2)


def deg_sweep(abin_t, mask_stack):
    n = abin_t.shape[0]
    nt = mask_stack.shape[1]
    tj = _pick_tile(n)
    ti = _pick_tile(n)
    return pl.pallas_call(
        _deg_all_kernel,
        out_shape=jax.ShapeDtypeStruct((n, nt), jnp.float32),
        grid_spec=pltpu.PrefetchScalarGridSpec(
            num_scalar_prefetch=0,
            grid=(n // tj, n // ti),
            in_specs=[
                pl.BlockSpec((tj, ti), lambda j, i: (j, i)),
                pl.BlockSpec((ti, nt), lambda j, i: (i, 0)),
            ],
            out_specs=pl.BlockSpec((tj, nt), lambda j, i: (j, 0)),
        ),
        compiler_params=_cparams(("parallel", "arbitrary")),
    )(abin_t, mask_stack)


def sgc_linear(h, w, dis_col, mask_col):
    n, fin = h.shape
    fout = w.shape[1]
    tm = _pick_tile(n)
    return pl.pallas_call(
        _linear_scale_kernel,
        out_shape=(jax.ShapeDtypeStruct((n, fout), jnp.float32),
                   jax.ShapeDtypeStruct((n, fout), jnp.bfloat16)),
        grid_spec=pltpu.PrefetchScalarGridSpec(
            num_scalar_prefetch=0,
            grid=(n // tm,),
            in_specs=[
                pl.BlockSpec((tm, fin), lambda i: (i, 0)),
                pl.BlockSpec((fin, fout), lambda i: (0, 0)),
                pl.BlockSpec((tm, 1), lambda i: (i, 0)),
                pl.BlockSpec((tm, 1), lambda i: (i, 0)),
            ],
            out_specs=(pl.BlockSpec((tm, fout), lambda i: (i, 0)),
                       pl.BlockSpec((tm, fout), lambda i: (i, 0))),
        ),
        compiler_params=_cparams(("parallel",)),
    )(h, w, dis_col, mask_col)


def sgc_prop(abin_t, y_masked, mask_col, y, dis_col, b, last_layer):
    n = abin_t.shape[0]
    fout = y.shape[1]
    tj = _pick_tile(n)
    ti = _pick_tile(n)
    kern = functools.partial(_sgc_prop_kernel, last_layer=last_layer)
    return pl.pallas_call(
        kern,
        out_shape=jax.ShapeDtypeStruct((n, fout), jnp.float32),
        grid_spec=pltpu.PrefetchScalarGridSpec(
            num_scalar_prefetch=0,
            grid=(n // tj, n // ti),
            in_specs=[
                pl.BlockSpec((tj, ti), lambda j, i: (j, i)),     # Abin^T (bf16)
                pl.BlockSpec((ti, fout), lambda j, i: (i, 0)),   # mask*y (bf16)
                pl.BlockSpec((tj, 1), lambda j, i: (j, 0)),      # mask (rows)
                pl.BlockSpec((tj, fout), lambda j, i: (j, 0)),   # y (self-loop)
                pl.BlockSpec((tj, 1), lambda j, i: (j, 0)),      # dis
                pl.BlockSpec((1, fout), lambda j, i: (0, 0)),    # bias
            ],
            out_specs=pl.BlockSpec((tj, fout), lambda j, i: (j, 0)),
            scratch_shapes=[pltpu.VMEM((tj, fout), jnp.float32)],
        ),
        compiler_params=_cparams(("parallel", "arbitrary")),
    )(abin_t, y_masked, mask_col, y, dis_col, b)


# ---------------------------------------------------------------- forward --
def _batched_head_params(params):
    heads = [params["curv_mlp"]] + list(params["fn_mlp"])
    nh = heads[0]["w1"].shape[1]
    w1 = jnp.concatenate([hp["w1"] for hp in heads], axis=1)     # (nfeat, H*nhid)
    b1 = jnp.concatenate([hp["b1"] for hp in heads], axis=1)     # (1, H*nhid)
    b2 = jnp.concatenate([hp["b2"] for hp in heads], axis=1)     # (1, H)
    w2 = jnp.zeros((len(heads) * nh, len(heads)), jnp.float32)   # block diagonal
    for k, hp in enumerate(heads):
        w2 = w2.at[k * nh:(k + 1) * nh, k:k + 1].set(hp["w2"])
    return w1, b1, w2, b2


def dc_sgc_forward(params, x, adj, p=5):
    n = x.shape[0]
    iterations = len(params["sgc"])
    nf = len(params["fn_mlp"])

    # pad node count to a multiple of 128 (zero rows/cols; excluded below)
    pad = (-n) % _PAD
    np_ = n + pad
    x_p = jnp.pad(x, ((0, pad), (0, 0))) if pad else x
    adj_p = jnp.pad(adj, ((0, pad), (0, pad))) if pad else adj
    wts_p = (jnp.pad(params["weights"], ((0, pad), (0, pad)))
             if pad else params["weights"])
    valid = (jnp.arange(np_) < n).astype(jnp.float32)            # (np_,)

    # all curvature MLPs in one lane-dense call: col 0 = kappa, cols 1.. = f_k
    w1, b1, w2, b2 = _batched_head_params(params)
    heads = batched_curv_mlp(x_p, w1, b1, w2, b2)                # (np_, 1+nf)
    heads_row = heads.T                                          # (1+nf, np_)
    kappa = heads[:, 0]

    # curvature-constraint loss: two tiled sweeps + a parallel relu-outer kernel
    gam, dlf = loss_pass1(adj_p, wts_p, heads, heads_row, nf)
    g2 = loss_pass2(adj_p, wts_p, heads, heads_row, gam, gam.T, dlf, dlf.T)
    per_node_loss = relu_loss(heads_row[0:1, :], valid[None, :], gam, g2)
    curv_loss = jnp.sum(per_node_loss)

    # SGC: binarized A^T (exact 0/1, zero diagonal) materialized once in bf16;
    # self-loops and the top-k node masks are folded into vectors.
    offdiag = ~jnp.eye(np_, dtype=bool)
    abin_t = jnp.where((jnp.transpose(adj_p) != 0.0) & offdiag,
                       1.0, 0.0).astype(jnp.bfloat16)

    kappa_for_topk = jnp.where(valid > 0.0, kappa, -1.0)
    masks = []
    for t in range(iterations):
        num_to_remove = int(n * (p * t) / 100)
        if num_to_remove > 0:
            _, top_idx = jax.lax.top_k(kappa_for_topk, num_to_remove)
            m = jnp.ones((np_,), jnp.float32).at[top_idx].set(0.0)
        else:
            m = jnp.ones((np_,), jnp.float32)
        masks.append(m)
    mask_stack = jnp.stack(masks, axis=1).astype(jnp.bfloat16)   # (np_, T)

    # degrees for ALL iterations in a single adjacency sweep
    deg_nbr = deg_sweep(abin_t, mask_stack)                      # (np_, T)

    h = x_p
    for t in range(iterations):
        mask = masks[t]
        deg = mask * deg_nbr[:, t] + 1.0                         # + self-loop
        dis = jax.lax.rsqrt(deg)
        lw, lb = params["sgc"][t]
        y, y_masked = sgc_linear(h, lw, dis[:, None], mask[:, None])
        h = sgc_prop(abin_t, y_masked, mask[:, None], y, dis[:, None], lb,
                     last_layer=(t == iterations - 1))
        # F.dropout(x, dropout) is the identity in the eval-mode forward pass.
    out = h[:n] if pad else h
    return out, 1.0 * curv_loss


# ----------------------------------------------------------------- params --
def init_params(key, n, nfeat, nhid, nclass, iterations, fn_count=3):
    keys = jax.random.split(key, 4 + fn_count + iterations)

    def mlp_params(k):
        k1, k2, k3, k4 = jax.random.split(k, 4)
        return {
            "w1": jax.random.normal(k1, (nfeat, nhid), jnp.float32) / jnp.sqrt(float(nfeat)),
            "b1": jax.random.normal(k2, (1, nhid), jnp.float32) * 0.1,
            "w2": jax.random.normal(k3, (nhid, 1), jnp.float32) / jnp.sqrt(float(nhid)),
            "b2": jax.random.normal(k4, (1, 1), jnp.float32) * 0.1,
        }

    params = {
        "curv_mlp": mlp_params(keys[0]),
        "fn_mlp": [mlp_params(keys[1 + i]) for i in range(fn_count)],
        "weights": jax.random.normal(keys[1 + fn_count], (n, n), jnp.float32),
    }
    sgc = []
    for i in range(iterations):
        fin = nfeat if i == 0 else nhid
        fout = nclass if i == iterations - 1 else nhid
        kw, kb = jax.random.split(keys[2 + fn_count + i], 2)
        w = jax.random.normal(kw, (fin, fout), jnp.float32) / jnp.sqrt(float(fin))
        b = jax.random.normal(kb, (1, fout), jnp.float32) * 0.1
        sgc.append((w, b))
    params["sgc"] = sgc
    return params


# ------------------------------------------------------------------- main --
if __name__ == "__main__":
    # N deliberately NOT a multiple of 128 so the padding path and multi-block
    # accumulation grids (128-tiles over a 384-padded graph) are exercised.
    N, NFEAT, NHID, NCLASS = 300, 32, 32, 8
    ITERATIONS, FN_COUNT, P = 3, 3, 5

    key = jax.random.PRNGKey(0)
    kx, kadj, kparam = jax.random.split(key, 3)
    x = jax.random.normal(kx, (N, NFEAT), jnp.float32)
    a = (jax.random.uniform(kadj, (N, N)) < 0.1).astype(jnp.float32)
    adj = jnp.maximum(a, a.T) * (1.0 - jnp.eye(N, dtype=jnp.float32))  # symmetric 0/1

    params = init_params(kparam, N, NFEAT, NHID, NCLASS, ITERATIONS, FN_COUNT)

    logp, curv_loss = dc_sgc_forward(params, x, adj, p=P)
    jax.block_until_ready((logp, curv_loss))

    assert logp.shape == (N, NCLASS)
    assert curv_loss.shape == ()
    assert bool(jnp.all(jnp.isfinite(logp))) and bool(jnp.isfinite(curv_loss))
    print("KERNEL_OK")
</pallas_src>

<mosaic_0001>
module attributes {stable_mosaic.version = 11 : i64} {
  func.func @_mlp_heads_kernel(%arg0: i32, %arg1: memref<128x32xf32, #tpu.memory_space<vmem>>, %arg2: memref<32x128xf32, #tpu.memory_space<vmem>>, %arg3: memref<1x128xf32, #tpu.memory_space<vmem>>, %arg4: memref<128x4xf32, #tpu.memory_space<vmem>>, %arg5: memref<1x4xf32, #tpu.memory_space<vmem>>, %arg6: memref<128x4xf32, #tpu.memory_space<vmem>>) attributes {dimension_semantics = [#tpu.dimension_semantics<parallel>], iteration_bounds = array<i64: 3>, scalar_prefetch = 0 : i64, scratch_operands = 0 : i64, tpu.core_type = #tpu.core_type<tc>, window_params = [{transform_indices = @transform_0, window_bounds = array<i64: 128, 32>}, {pipeline_mode = #tpu.pipeline_mode<synchronous>, transform_indices = @transform_1, window_bounds = array<i64: 32, 128>}, {pipeline_mode = #tpu.pipeline_mode<synchronous>, transform_indices = @transform_2, window_bounds = array<i64: 1, 128>}, {pipeline_mode = #tpu.pipeline_mode<synchronous>, transform_indices = @transform_3, window_bounds = array<i64: 128, 4>}, {pipeline_mode = #tpu.pipeline_mode<synchronous>, transform_indices = @transform_4, window_bounds = array<i64: 1, 4>}, {transform_indices = @transform_5, window_bounds = array<i64: 128, 4>}]} {
    %c0 = arith.constant 0 : index
    %c0_0 = arith.constant 0 : index
    %0 = vector.load %arg1[%c0, %c0_0] : memref<128x32xf32, #tpu.memory_space<vmem>>, vector<128x32xf32>
    %c0_1 = arith.constant 0 : index
    %c0_2 = arith.constant 0 : index
    %1 = vector.load %arg2[%c0_1, %c0_2] : memref<32x128xf32, #tpu.memory_space<vmem>>, vector<32x128xf32>
    %cst = arith.constant dense<0.000000e+00> : vector<128x128xf32>
    %2 = tpu.matmul %0, %1, %cst {dimension_numbers = #tpu.dot_dimension_numbers<[1], [0], [0], [1], [0, 0, 1, 1], [], []>} : vector<128x32xf32>, vector<32x128xf32>, vector<128x128xf32> -> vector<128x128xf32>
    %c0_3 = arith.constant 0 : index
    %c0_4 = arith.constant 0 : index
    %3 = vector.load %arg3[%c0_3, %c0_4] : memref<1x128xf32, #tpu.memory_space<vmem>>, vector<1x128xf32>
    %4 = vector.broadcast %3 : vector<1x128xf32> to vector<128x128xf32>
    %5 = arith.addf %2, %4 : vector<128x128xf32>
    %cst_5 = arith.constant 0.000000e+00 : f32
    %6 = vector.broadcast %cst_5 : f32 to vector<128x128xf32>
    %7 = arith.maximumf %5, %6 : vector<128x128xf32>
    %c0_6 = arith.constant 0 : index
    %c0_7 = arith.constant 0 : index
    %8 = vector.load %arg4[%c0_6, %c0_7] : memref<128x4xf32, #tpu.memory_space<vmem>>, vector<128x4xf32>
    %cst_8 = arith.constant dense<0.000000e+00> : vector<128x4xf32>
    %9 = tpu.matmul %7, %8, %cst_8 {dimension_numbers = #tpu.dot_dimension_numbers<[1], [0], [0], [1], [0, 0, 1, 1], [], []>} : vector<128x128xf32>, vector<128x4xf32>, vector<128x4xf32> -> vector<128x4xf32>
    %c0_9 = arith.constant 0 : index
    %c0_10 = arith.constant 0 : index
    %10 = vector.load %arg5[%c0_9, %c0_10] : memref<1x4xf32, #tpu.memory_space<vmem>>, vector<1x4xf32>
    %11 = vector.broadcast %10 : vector<1x4xf32> to vector<128x4xf32>
    %12 = arith.addf %9, %11 : vector<128x4xf32>
    %13 = arith.negf %12 : vector<128x4xf32>
    %14 = math.exp %13 : vector<128x4xf32>
    %cst_11 = arith.constant 1.000000e+00 : f32
    %15 = vector.broadcast %cst_11 : f32 to vector<128x4xf32>
    %16 = arith.addf %15, %14 : vector<128x4xf32>
    %17 = arith.divf %15, %16 : vector<128x4xf32>
    %c0_12 = arith.constant 0 : index
    %c0_13 = arith.constant 0 : index
    %18 = vector.load %arg6[%c0_12, %c0_13] : memref<128x4xf32, #tpu.memory_space<vmem>>, vector<128x4xf32>
    tpu.vector_store %arg6[%c0_12, %c0_13], %17 {strides = array<i32>} : memref<128x4xf32, #tpu.memory_space<vmem>>, vector<128x4xf32>,
    return
  }
  func.func @transform_0(%arg0: i32) -> (i32, i32) {
    %c0_i32 = arith.constant 0 : i32
    %c0_i32_0 = arith.constant 0 : i32
    return %arg0, %c0_i32 : i32, i32
  }
  func.func @transform_1(%arg0: i32) -> (i32, i32) {
    %c0_i32 = arith.constant 0 : i32
    %c0_i32_0 = arith.constant 0 : i32
    %c0_i32_1 = arith.constant 0 : i32
    return %c0_i32, %c0_i32_0 : i32, i32
  }
  func.func @transform_2(%arg0: i32) -> (i32, i32) {
    %c0_i32 = arith.constant 0 : i32
    %c0_i32_0 = arith.constant 0 : i32
    %c0_i32_1 = arith.constant 0 : i32
    return %c0_i32, %c0_i32_0 : i32, i32
  }
  func.func @transform_3(%arg0: i32) -> (i32, i32) {
    %c0_i32 = arith.constant 0 : i32
    %c0_i32_0 = arith.constant 0 : i32
    %c0_i32_1 = arith.constant 0 : i32
    return %c0_i32, %c0_i32_0 : i32, i32
  }
  func.func @transform_4(%arg0: i32) -> (i32, i32) {
    %c0_i32 = arith.constant 0 : i32
    %c0_i32_0 = arith.constant 0 : i32
    %c0_i32_1 = arith.constant 0 : i32
    return %c0_i32, %c0_i32_0 : i32, i32
  }
  func.func @transform_5(%arg0: i32) -> (i32, i32) {
    %c0_i32 = arith.constant 0 : i32
    %c0_i32_0 = arith.constant 0 : i32
    return %arg0, %c0_i32 : i32, i32
  }
}

</mosaic_0001>

<llo_original>
// kernel: tpu_custom_call.1
$region0: #{tpu_custom_call.1}
  #allocation0 [shape = 'u32[]', space=smem, size = 0x4, offset = 0x4, fixed_abs, tag = 'smem constant byte address 0x4 - core index']
  #allocation1 [shape = 'u32[144,128]{1,0:T(1,128)}', space=vmem, size = 0x12000, scoped, tag = 'internal scratch']
  %s0 = inlined_call_operand.vmem [shape: f32[384,32], index: 0, kind: input, shape index: {}]
  %s1 = inlined_call_operand.vmem [shape: f32[32,128], index: 1, kind: input, shape index: {}]
  %s2 = inlined_call_operand.vmem [shape: f32[1,128], index: 2, kind: input, shape index: {}]
  %s3 = inlined_call_operand.vmem [shape: f32[128,4], index: 3, kind: input, shape index: {}]
  %s4 = inlined_call_operand.vmem [shape: f32[1,4], index: 4, kind: input, shape index: {}]
  %s5 = inlined_call_operand.vmem [shape: f32[384,4], index: 5, kind: output, shape index: {}]
  %s6 = sld [smem:[#allocation0]]
  $region53: #{tpu_custom_call.1} parent=0
    _
  %s8 = ssub.s32 1, %s6
  %s9 = scalar_select 0, %s8, %s6
  loop: start=0, step=1, limit=5
  $region2: #{tpu_custom_call.1} parent=0 // loop_pre_header
    _
  $region3: #{tpu_custom_call.1} parent=0 // loop_header
    %s11 = sphi 0, %s15
    %p12 = scmp.ge.s32.totalorder %s11, 5
    %s21 = sphi 0, %s23
    %s24 = sphi 0, %s21
    %s25 = sphi 0, %s24
    %s41 = sphi 0, %s25
    %s45 = sphi 0, %s45
    %s47 = sphi 0, %s45
    %s48 = sphi 0, %s47
    %s62 = sphi 0, %s48
    %s66 = sphi 0, %s66
    %s68 = sphi 0, %s66
    %s69 = sphi 0, %s68
    %s83 = sphi 0, %s69
    %s87 = sphi 0, %s87
    %s89 = sphi 0, %s87
    %s90 = sphi 0, %s89
    %s104 = sphi 0, %s90
    %s108 = sphi 0, %s108
    %s110 = sphi 0, %s108
    %s111 = sphi 0, %s110
    %s125 = sphi 0, %s111
    %s131 = sphi 0, %s133
    %s134 = sphi 0, %s131
    %s135 = sphi 0, %s134
    %s151 = sphi 0, %s135
  $region4: #{tpu_custom_call.1} parent=0 // loop_header_branch
    %14 = sbr.rel (%p12) target = $region8
  $region5: #{tpu_custom_call.1} parent=0 // loop_body
    %s16 = ssub.s32 %s11, 1
    %s17 = ssub.s32 %s11, 2
    %s18 = sadd.s32 %s11, 1
    %s19 = ssub.s32 %s11, %s18
    %p20 = scmp.eq.s32.totalorder %s19, 0
    %s22 = sadd.s32 %s21, 1
    %s23 = scalar_select %p20, %s21, %s22
    %p26 = pneg %p20
    %p27 = scmp.eq.s32.totalorder %s11, 2
    %p28 = por %p26, %p27
    %p29 = scmp.ne.s32.totalorder %s21, %s24
    %p30 = scmp.eq.s32.totalorder %s11, 0
    %p31 = por %p29, %p30
    %p32 = scmp.ne.s32.totalorder %s21, %s24
    %p33 = scmp.eq.s32.totalorder %s16, 2
    %p34 = por %p32, %p33
    %p35 = scmp.ne.s32.totalorder %s24, %s25
    %p36 = scmp.eq.s32.totalorder %s16, 0
    %p37 = por %p35, %p36
    %p38 = scmp.ne.s32.totalorder %s24, %s25
    %p39 = scmp.eq.s32.totalorder %s17, 2
    %p40 = por %p38, %p39
    %p42 = scmp.ne.s32.totalorder %s25, %s41
    %p43 = scmp.eq.s32.totalorder %s17, 0
    %p44 = por %p42, %p43
    %s46 = sadd.s32 %s45, 1
    %p49 = scmp.eq.s32.totalorder %s11, 2
    %p50 = scmp.ne.s32.totalorder %s45, %s47
    %p51 = scmp.eq.s32.totalorder %s11, 0
    %p52 = por %p50, %p51
    %p53 = scmp.ne.s32.totalorder %s45, %s47
    %p54 = scmp.eq.s32.totalorder %s16, 2
    %p55 = por %p53, %p54
    %p56 = scmp.ne.s32.totalorder %s47, %s48
    %p57 = scmp.eq.s32.totalorder %s16, 0
    %p58 = por %p56, %p57
    %p59 = scmp.ne.s32.totalorder %s47, %s48
    %p60 = scmp.eq.s32.totalorder %s17, 2
    %p61 = por %p59, %p60
    %p63 = scmp.ne.s32.totalorder %s48, %s62
    %p64 = scmp.eq.s32.totalorder %s17, 0
    %p65 = por %p63, %p64
    %s67 = sadd.s32 %s66, 1
    %p70 = scmp.eq.s32.totalorder %s11, 2
    %p71 = scmp.ne.s32.totalorder %s66, %s68
    %p72 = scmp.eq.s32.totalorder %s11, 0
    %p73 = por %p71, %p72
    %p74 = scmp.ne.s32.totalorder %s66, %s68
    %p75 = scmp.eq.s32.totalorder %s16, 2
    %p76 = por %p74, %p75
    %p77 = scmp.ne.s32.totalorder %s68, %s69
    %p78 = scmp.eq.s32.totalorder %s16, 0
    %p79 = por %p77, %p78
    %p80 = scmp.ne.s32.totalorder %s68, %s69
    %p81 = scmp.eq.s32.totalorder %s17, 2
    %p82 = por %p80, %p81
    %p84 = scmp.ne.s32.totalorder %s69, %s83
    %p85 = scmp.eq.s32.totalorder %s17, 0
    %p86 = por %p84, %p85
    %s88 = sadd.s32 %s87, 1
    %p91 = scmp.eq.s32.totalorder %s11, 2
    %p92 = scmp.ne.s32.totalorder %s87, %s89
    %p93 = scmp.eq.s32.totalorder %s11, 0
    %p94 = por %p92, %p93
    %p95 = scmp.ne.s32.totalorder %s87, %s89
    %p96 = scmp.eq.s32.totalorder %s16, 2
    %p97 = por %p95, %p96
    %p98 = scmp.ne.s32.totalorder %s89, %s90
    %p99 = scmp.eq.s32.totalorder %s16, 0
    %p100 = por %p98, %p99
    %p101 = scmp.ne.s32.totalorder %s89, %s90
    %p102 = scmp.eq.s32.totalorder %s17, 2
    %p103 = por %p101, %p102
    %p105 = scmp.ne.s32.totalorder %s90, %s104
    %p106 = scmp.eq.s32.totalorder %s17, 0
    %p107 = por %p105, %p106
    %s109 = sadd.s32 %s108, 1
    %p112 = scmp.eq.s32.totalorder %s11, 2
    %p113 = scmp.ne.s32.totalorder %s108, %s110
    %p114 = scmp.eq.s32.totalorder %s11, 0
    %p115 = por %p113, %p114
    %p116 = scmp.ne.s32.totalorder %s108, %s110
    %p117 = scmp.eq.s32.totalorder %s16, 2
    %p118 = por %p116, %p117
    %p119 = scmp.ne.s32.totalorder %s110, %s111
    %p120 = scmp.eq.s32.totalorder %s16, 0
    %p121 = por %p119, %p120
    %p122 = scmp.ne.s32.totalorder %s110, %s111
    %p123 = scmp.eq.s32.totalorder %s17, 2
    %p124 = por %p122, %p123
    %p126 = scmp.ne.s32.totalorder %s111, %s125
    %p127 = scmp.eq.s32.totalorder %s17, 0
    %p128 = por %p126, %p127
    %s129 = ssub.s32 %s11, %s18
    %p130 = scmp.eq.s32.totalorder %s129, 0
    %s132 = sadd.s32 %s131, 1
    %s133 = scalar_select %p130, %s131, %s132
    %p136 = pneg %p130
    %p137 = scmp.eq.s32.totalorder %s11, 2
    %p138 = por %p136, %p137
    %p139 = scmp.ne.s32.totalorder %s131, %s134
    %p140 = scmp.eq.s32.totalorder %s11, 0
    %p141 = por %p139, %p140
    %p142 = scmp.ne.s32.totalorder %s131, %s134
    %p143 = scmp.eq.s32.totalorder %s16, 2
    %p144 = por %p142, %p143
    %p145 = scmp.ne.s32.totalorder %s134, %s135
    %p146 = scmp.eq.s32.totalorder %s16, 0
    %p147 = por %p145, %p146
    %p148 = scmp.ne.s32.totalorder %s134, %s135
    %p149 = scmp.eq.s32.totalorder %s17, 2
    %p150 = por %p148, %p149
    %p152 = scmp.ne.s32.totalorder %s135, %s151
    %p153 = scmp.eq.s32.totalorder %s17, 0
    %p154 = por %p152, %p153
    %p155 = scmp.le.s32.totalorder 1, %s11
    %p156 = scmp.lt.s32.totalorder %s11, 4
    %p157 = pnand %p155, %p156
    %p158 = pneg %p157
    // Predicated region
    $region9: #{tpu_custom_call.1} parent=5 // pred_check
      _
    $region10: #{tpu_custom_call.1} parent=5 // pred_check_branch
      %160 = sbr.rel (%p157) target = $region12
    $region11: #{tpu_custom_call.1} parent=5 // pred_region
      %s161 = ssub.s32 %s11, 1
      // Predicated region
      $region13: #{tpu_custom_call.1} parent=11 // pred_check
        %p162 = pneg %p58
      $region14: #{tpu_custom_call.1} parent=11 // pred_check_branch
        %164 = sbr.rel (%p162) target = $region16
      $region15: #{tpu_custom_call.1} parent=11 // pred_region
        _
      $region16: #{tpu_custom_call.1} parent=11 // pred_fallthru
        _
      // Predicated region
      $region17: #{tpu_custom_call.1} parent=11 // pred_check
        %p165 = pneg %p79
      $region18: #{tpu_custom_call.1} parent=11 // pred_check_branch
        %167 = sbr.rel (%p165) target = $region20
      $region19: #{tpu_custom_call.1} parent=11 // pred_region
        _
      $region20: #{tpu_custom_call.1} parent=11 // pred_fallthru
        _
      // Predicated region
      $region21: #{tpu_custom_call.1} parent=11 // pred_check
        %p168 = pneg %p100
      $region22: #{tpu_custom_call.1} parent=11 // pred_check_branch
        %170 = sbr.rel (%p168) target = $region24
      $region23: #{tpu_custom_call.1} parent=11 // pred_region
        _
      $region24: #{tpu_custom_call.1} parent=11 // pred_fallthru
        _
      // Predicated region
      $region25: #{tpu_custom_call.1} parent=11 // pred_check
        %p171 = pneg %p121
      $region26: #{tpu_custom_call.1} parent=11 // pred_check_branch
        %173 = sbr.rel (%p171) target = $region28
      $region27: #{tpu_custom_call.1} parent=11 // pred_region
        _
      $region28: #{tpu_custom_call.1} parent=11 // pred_fallthru
        _
    $region12: #{tpu_custom_call.1} parent=5 // pred_fallthru
      _
    %p174 = scmp.lt.s32.totalorder %s11, 3
    // Predicated region
    $region29: #{tpu_custom_call.1} parent=5 // pred_check
      %p175 = pneg %p174
    $region30: #{tpu_custom_call.1} parent=5 // pred_check_branch
      %177 = sbr.rel (%p175) target = $region32
    $region31: #{tpu_custom_call.1} parent=5 // pred_region
      // Predicated region
      $region33: #{tpu_custom_call.1} parent=31 // pred_check
        %p178 = pneg %p31
      $region34: #{tpu_custom_call.1} parent=31 // pred_check_branch
        %180 = sbr.rel (%p178) target = $region36
      $region35: #{tpu_custom_call.1} parent=31 // pred_region
        %s181 = smul.u32 16, %s11
        %p182 = scmp.lt.s32.totalorder %s181, 47
        %s183 = scalar_select %p182, %s181, 47
        %s184 = smul.addr %s183, 8
        %s185 = scalar_lea.vmem %s0, %s184
        %s186 = smul.u32 16, %s11
      $region36: #{tpu_custom_call.1} parent=31 // pred_fallthru
        _
    $region32: #{tpu_custom_call.1} parent=5 // pred_fallthru
      _
    %p187 = scmp.le.s32.totalorder 1, %s11
    %p188 = scmp.lt.s32.totalorder %s11, 4
    %p189 = pnand %p187, %p188
    %p190 = pneg %p189
    // Predicated region
    $region37: #{tpu_custom_call.1} parent=5 // pred_check
      _
    $region38: #{tpu_custom_call.1} parent=5 // pred_check_branch
      %192 = sbr.rel (%p189) target = $region40
    $region39: #{tpu_custom_call.1} parent=5 // pred_region
      %s193 = ssub.s32 %s11, 1
      %s194 = smul.u32 16, %s16
      %p195 = scmp.lt.s32.totalorder %s194, 47
      %s196 = scalar_select %p195, %s194, 47
      %s197 = smul.addr %s196, 8
      %s198 = scalar_lea.vmem %s0, %s197
      %p199 = pneg %p37
      %p200 = pneg %p34
      %p201 = pneg %p58
      %p202 = pneg %p55
      %p203 = pneg %p79
      %p204 = pneg %p76
      %p205 = pneg %p100
      %p206 = pneg %p97
      %p207 = pneg %p121
      %p208 = pneg %p118
      %p209 = pneg %p147
      %p210 = pneg %p144
      %s211 = smul.u32 16, %s16
      %p212 = scmp.lt.s32.totalorder %s211, 47
      %s213 = scalar_select %p212, %s211, 47
      %s214 = smul.addr %s213, 8
      %s215 = scalar_lea.vmem %s5, %s214
      %s216 = smul.u32 16, %s16
      %p217 = scmp.lt.s32.totalorder %s216, 47
      %s218 = scalar_select %p217, %s216, 47
      %s219 = smul.addr %s218, 8
      %s220 = scalar_lea.vmem %s0, %s219
      %s221 = smul.u32 16, %s16
      %s222 = smul.u32 16, %s16
      %p223 = scmp.lt.s32.totalorder %s222, 47
      %s224 = scalar_select %p223, %s222, 47
      %s225 = smul.addr %s224, 8
      %s226 = scalar_lea.vmem %s5, %s225
      %s227 = smul.u32 16, %s16
      %v228 = vld [vmem:[%s220] sm:$0xff]
      %v229 = vld [vmem:[%s220 + $0x8] sm:$0xff]
      %v230 = vld [vmem:[%s220 + $0x10] sm:$0xff]
      %v231 = vld [vmem:[%s220 + $0x18] sm:$0xff]
      %v232 = vld [vmem:[%s220 + $0x20] sm:$0xff]
      %v233 = vld [vmem:[%s220 + $0x28] sm:$0xff]
      %v234 = vld [vmem:[%s220 + $0x30] sm:$0xff]
      %v235 = vld [vmem:[%s220 + $0x38] sm:$0xff]
      %v236 = vld [vmem:[%s220 + $0x40] sm:$0xff]
      %v237 = vld [vmem:[%s220 + $0x48] sm:$0xff]
      %v238 = vld [vmem:[%s220 + $0x50] sm:$0xff]
      %v239 = vld [vmem:[%s220 + $0x58] sm:$0xff]
      %v240 = vld [vmem:[%s220 + $0x60] sm:$0xff]
      %v241 = vld [vmem:[%s220 + $0x68] sm:$0xff]
      %v242 = vld [vmem:[%s220 + $0x70] sm:$0xff]
      %v243 = vld [vmem:[%s220 + $0x78] sm:$0xff]
      %v244 = vld [vmem:[%s1] sm:$0xff]
      %v245 = vld [vmem:[%s1 + $0x8] sm:$0xff]
      %v246 = vld [vmem:[%s1 + $0x10] sm:$0xff]
      %v247 = vld [vmem:[%s1 + $0x18] sm:$0xff]
      %v248 = vld [vmem:[%s2] sm:$0x1]
      %v250 = vlaneseq
      %v251 = vshrl.u32 %v250, 7
      %v252 = vsub.s32 0, %v251
      %v253 = vrot.slane %v248, %v252
      %vm255 = vcmask 261120
      %v257 = vsel %vm255, %v228, 0
      %v260 = vsel %vm255, %v229, 0
      %v263 = vsel %vm255, %v230, 0
      %v266 = vsel %vm255, %v231, 0
      %v269 = vsel %vm255, %v232, 0
      %v272 = vsel %vm255, %v233, 0
      %v275 = vsel %vm255, %v234, 0
      %v278 = vsel %vm255, %v235, 0
      %v281 = vsel %vm255, %v236, 0
      %v284 = vsel %vm255, %v237, 0
      %v287 = vsel %vm255, %v238, 0
      %v290 = vsel %vm255, %v239, 0
      %v293 = vsel %vm255, %v240, 0
      %v296 = vsel %vm255, %v241, 0
      %v299 = vsel %vm255, %v242, 0
      %v302 = vsel %vm255, %v243, 0
      %304 = vmatprep.subr.mxu0 0.0
      %305 = vmatpush1.msra.mxu0 0.0
      %306 = vmatprep.subr.mxu0 0.0
      %307 = vmatpush1.msra.mxu0 0.0
      %308 = vmatprep.subr.mxu0 0.0
      %309 = vmatpush1.msra.mxu0 0.0
      %310 = vmatprep.subr.mxu0 0.0
      %311 = vmatpush1.msra.mxu0 0.0
      %312 = vmatprep.subr.mxu0 0.0
      %313 = vmatpush1.msra.mxu0 0.0
      %314 = vmatprep.subr.mxu0 0.0
      %315 = vmatpush1.msra.mxu0 0.0
      %316 = vmatprep.subr.mxu0 0.0
      %317 = vmatpush1.msra.mxu0 0.0
      %318 = vmatprep.subr.mxu0 0.0
      %319 = vmatpush1.msra.mxu0 0.0
      %320 = vmatprep.subr.mxu0 0.0
      %321 = vmatpush1.msra.mxu0 0.0
      %322 = vmatprep.subr.mxu0 0.0
      %323 = vmatpush1.msra.mxu0 0.0
      %324 = vmatprep.subr.mxu0 0.0
      %325 = vmatpush1.msra.mxu0 0.0
      %326 = vmatprep.subr.mxu0 0.0
      %327 = vmatpush1.msra.mxu0 0.0
      %328 = vmatprep.subr.mxu0 0.0
      %329 = vmatpush1.msra.mxu0 %v247
      %330 = vmatprep.subr.mxu0 0.0
      %331 = vmatpush1.msra.mxu0 %v246
      %332 = vmatprep.subr.mxu0 0.0
      %333 = vmatpush1.msra.mxu0 %v245
      %334 = vmatprep.subr.mxu0 0.0
      %335 = vmatpush1.msra.mxu0 %v244
      %336 = vmatprep.subr.mxu0 0.0
      %337 = vmatpush2.msra.mxu0 0.0
      %338 = vmatprep.subr.mxu0 0.0
      %339 = vmatpush2.msra.mxu0 0.0
      %340 = vmatprep.subr.mxu0 0.0
      %341 = vmatpush2.msra.mxu0 0.0
      %342 = vmatprep.subr.mxu0 0.0
      %343 = vmatpush2.msra.mxu0 0.0
      %344 = vmatprep.subr.mxu0 0.0
      %345 = vmatpush2.msra.mxu0 0.0
      %346 = vmatprep.subr.mxu0 0.0
      %347 = vmatpush2.msra.mxu0 0.0
      %348 = vmatprep.subr.mxu0 0.0
      %349 = vmatpush2.msra.mxu0 0.0
      %350 = vmatprep.subr.mxu0 0.0
      %351 = vmatpush2.msra.mxu0 0.0
      %352 = vmatprep.subr.mxu0 0.0
      %353 = vmatpush2.msra.mxu0 0.0
      %354 = vmatprep.subr.mxu0 0.0
      %355 = vmatpush2.msra.mxu0 0.0
      %356 = vmatprep.subr.mxu0 0.0
      %357 = vmatpush2.msra.mxu0 0.0
      %358 = vmatprep.subr.mxu0 0.0
      %359 = vmatpush2.msra.mxu0 0.0
      %360 = vmatprep.subr.mxu0 0.0
      %361 = vmatpush2.msra.mxu0 0.0
      %362 = vmatprep.subr.mxu0 0.0
      %363 = vmatpush2.msra.mxu0 0.0
      %364 = vmatprep.subr.mxu0 0.0
      %365 = vmatpush2.msra.mxu0 0.0
      %366 = vmatprep.subr.mxu0 0.0
      %367 = vmatpush2.msra.mxu0 0.0
      %368 = vmatprep.mubr.f32.mxu0 0.0
      %369 = vmatmul.mubr.f32.gmra.mxu0 %v257
      %v370 = vpop.f32.mrf.mxu0
      %v371 = vadd.f32 %v253, %v370
      %v372 = vpop.f32.mrf.mxu0
      %373 = vmatprep.mubr.f32.mxu0 0.0
      %374 = vmatmul.mubr.f32.gmra.mxu0 %v260
      %v375 = vpop.f32.mrf.mxu0
      %v376 = vadd.f32 %v253, %v375
      %v377 = vpop.f32.mrf.mxu0
      %378 = vmatprep.mubr.f32.mxu0 0.0
      %379 = vmatmul.mubr.f32.gmra.mxu0 %v263
      %v380 = vpop.f32.mrf.mxu0
      %v381 = vadd.f32 %v253, %v380
      %v382 = vpop.f32.mrf.mxu0
      %383 = vmatprep.mubr.f32.mxu0 0.0
      %384 = vmatmul.mubr.f32.gmra.mxu0 %v266
      %v385 = vpop.f32.mrf.mxu0
      %v386 = vadd.f32 %v253, %v385
      %v387 = vpop.f32.mrf.mxu0
      %388 = vmatprep.mubr.f32.mxu0 0.0
      %389 = vmatmul.mubr.f32.gmra.mxu0 %v269
      %v390 = vpop.f32.mrf.mxu0
      %v391 = vadd.f32 %v253, %v390
      %v392 = vpop.f32.mrf.mxu0
      %393 = vmatprep.mubr.f32.mxu0 0.0
      %394 = vmatmul.mubr.f32.gmra.mxu0 %v272
      %v395 = vpop.f32.mrf.mxu0
      %v396 = vadd.f32 %v253, %v395
      %v397 = vpop.f32.mrf.mxu0
      %398 = vmatprep.mubr.f32.mxu0 0.0
      %399 = vmatmul.mubr.f32.gmra.mxu0 %v275
      %v400 = vpop.f32.mrf.mxu0
      %v401 = vadd.f32 %v253, %v400
      %v402 = vpop.f32.mrf.mxu0
      %403 = vmatprep.mubr.f32.mxu0 0.0
      %404 = vmatmul.mubr.f32.gmra.mxu0 %v278
      %v405 = vpop.f32.mrf.mxu0
      %v406 = vadd.f32 %v253, %v405
      %v407 = vpop.f32.mrf.mxu0
      %408 = vmatprep.mubr.f32.mxu0 0.0
      %409 = vmatmul.mubr.f32.gmra.mxu0 %v281
      %v410 = vpop.f32.mrf.mxu0
      %v411 = vadd.f32 %v253, %v410
      %v412 = vpop.f32.mrf.mxu0
      %413 = vmatprep.mubr.f32.mxu0 0.0
      %414 = vmatmul.mubr.f32.gmra.mxu0 %v284
      %v415 = vpop.f32.mrf.mxu0
      %v416 = vadd.f32 %v253, %v415
      %v417 = vpop.f32.mrf.mxu0
      %418 = vmatprep.mubr.f32.mxu0 0.0
      %419 = vmatmul.mubr.f32.gmra.mxu0 %v287
      %v420 = vpop.f32.mrf.mxu0
      %v421 = vadd.f32 %v253, %v420
      %v422 = vpop.f32.mrf.mxu0
      %423 = vmatprep.mubr.f32.mxu0 0.0
      %424 = vmatmul.mubr.f32.gmra.mxu0 %v290
      %v425 = vpop.f32.mrf.mxu0
      %v426 = vadd.f32 %v253, %v425
      %v427 = vpop.f32.mrf.mxu0
      %428 = vmatprep.mubr.f32.mxu0 0.0
      %429 = vmatmul.mubr.f32.gmra.mxu0 %v293
      %v430 = vpop.f32.mrf.mxu0
      %v431 = vadd.f32 %v253, %v430
      %v432 = vpop.f32.mrf.mxu0
      %433 = vmatprep.mubr.f32.mxu0 0.0
      %434 = vmatmul.mubr.f32.gmra.mxu0 %v296
      %v435 = vpop.f32.mrf.mxu0
      %v436 = vadd.f32 %v253, %v435
      %v437 = vpop.f32.mrf.mxu0
      %438 = vmatprep.mubr.f32.mxu0 0.0
      %439 = vmatmul.mubr.f32.gmra.mxu0 %v299
      %v440 = vpop.f32.mrf.mxu0
      %v441 = vadd.f32 %v253, %v440
      %v442 = vpop.f32.mrf.mxu0
      %443 = vmatprep.mubr.f32.mxu0 0.0
      %444 = vmatmul.mubr.f32.gmra.mxu0 %v302
      %v445 = vpop.f32.mrf.mxu0
      %v446 = vadd.f32 %v253, %v445
      %v447 = vpop.f32.mrf.mxu0
      %448 = vdwg.mxu0
      %v449 = vmax.f32 %v371, 0.0
      %v450 = vmax.f32 %v376, 0.0
      %v451 = vmax.f32 %v381, 0.0
      %v452 = vmax.f32 %v386, 0.0
      %v453 = vmax.f32 %v391, 0.0
      %v454 = vmax.f32 %v396, 0.0
      %v455 = vmax.f32 %v401, 0.0
      %v456 = vmax.f32 %v406, 0.0
      %v457 = vmax.f32 %v411, 0.0
      %v458 = vmax.f32 %v416, 0.0
      %v459 = vmax.f32 %v421, 0.0
      %v460 = vmax.f32 %v426, 0.0
      %v461 = vmax.f32 %v431, 0.0
      %v462 = vmax.f32 %v436, 0.0
      %v463 = vmax.f32 %v441, 0.0
      %v464 = vmax.f32 %v446, 0.0
      %v465 = vld [vmem:[%s3] sm:$0xff]
      %v466 = vld [vmem:[%s3 + $0x8] sm:$0xff]
      %v467 = vld [vmem:[%s3 + $0x10] sm:$0xff]
      %v468 = vld [vmem:[%s3 + $0x18] sm:$0xff]
      %v469 = vld [vmem:[%s3 + $0x20] sm:$0xff]
      %v470 = vld [vmem:[%s3 + $0x28] sm:$0xff]
      %v471 = vld [vmem:[%s3 + $0x30] sm:$0xff]
      %v472 = vld [vmem:[%s3 + $0x38] sm:$0xff]
      %v473 = vld [vmem:[%s3 + $0x40] sm:$0xff]
      %v474 = vld [vmem:[%s3 + $0x48] sm:$0xff]
      %v475 = vld [vmem:[%s3 + $0x50] sm:$0xff]
      %v476 = vld [vmem:[%s3 + $0x58] sm:$0xff]
      %v477 = vld [vmem:[%s3 + $0x60] sm:$0xff]
      %v478 = vld [vmem:[%s3 + $0x68] sm:$0xff]
      %v479 = vld [vmem:[%s3 + $0x70] sm:$0xff]
      %v480 = vld [vmem:[%s3 + $0x78] sm:$0xff]
      %v481 = vld [vmem:[%s4] sm:$0x1]
      %v483 = vlaneseq
      %v484 = vshrl.u32 %v483, 7
      %v485 = vsub.s32 0, %v484
      %v486 = vrot.slane %v481, %v485
      %488 = vmatprep.subr.mxu0 0.0
      %489 = vmatpush1.msra.mxu0 %v480
      %490 = vmatprep.subr.mxu0 0.0
      %491 = vmatpush1.msra.mxu0 %v479
      %492 = vmatprep.subr.mxu0 0.0
      %493 = vmatpush1.msra.mxu0 %v478
      %494 = vmatprep.subr.mxu0 0.0
      %495 = vmatpush1.msra.mxu0 %v477
      %496 = vmatprep.subr.mxu0 0.0
      %497 = vmatpush1.msra.mxu0 %v476
      %498 = vmatprep.subr.mxu0 0.0
      %499 = vmatpush1.msra.mxu0 %v475
      %500 = vmatprep.subr.mxu0 0.0
      %501 = vmatpush1.msra.mxu0 %v474
      %502 = vmatprep.subr.mxu0 0.0
      %503 = vmatpush1.msra.mxu0 %v473
      %504 = vmatprep.subr.mxu0 0.0
      %505 = vmatpush1.msra.mxu0 %v472
      %506 = vmatprep.subr.mxu0 0.0
      %507 = vmatpush1.msra.mxu0 %v471
      %508 = vmatprep.subr.mxu0 0.0
      %509 = vmatpush1.msra.mxu0 %v470
      %510 = vmatprep.subr.mxu0 0.0
      %511 = vmatpush1.msra.mxu0 %v469
      %512 = vmatprep.subr.mxu0 0.0
      %513 = vmatpush1.msra.mxu0 %v468
      %514 = vmatprep.subr.mxu0 0.0
      %515 = vmatpush1.msra.mxu0 %v467
      %516 = vmatprep.subr.mxu0 0.0
      %517 = vmatpush1.msra.mxu0 %v466
      %518 = vmatprep.subr.mxu0 0.0
      %519 = vmatpush1.msra.mxu0 %v465
      %520 = vmatprep.subr.mxu0 0.0
      %521 = vmatpush2.msra.mxu0 0.0
      %522 = vmatprep.subr.mxu0 0.0
      %523 = vmatpush2.msra.mxu0 0.0
      %524 = vmatprep.subr.mxu0 0.0
      %525 = vmatpush2.msra.mxu0 0.0
      %526 = vmatprep.subr.mxu0 0.0
      %527 = vmatpush2.msra.mxu0 0.0
      %528 = vmatprep.subr.mxu0 0.0
      %529 = vmatpush2.msra.mxu0 0.0
      %530 = vmatprep.subr.mxu0 0.0
      %531 = vmatpush2.msra.mxu0 0.0
      %532 = vmatprep.subr.mxu0 0.0
      %533 = vmatpush2.msra.mxu0 0.0
      %534 = vmatprep.subr.mxu0 0.0
      %535 = vmatpush2.msra.mxu0 0.0
      %536 = vmatprep.subr.mxu0 0.0
      %537 = vmatpush2.msra.mxu0 0.0
      %538 = vmatprep.subr.mxu0 0.0
      %539 = vmatpush2.msra.mxu0 0.0
      %540 = vmatprep.subr.mxu0 0.0
      %541 = vmatpush2.msra.mxu0 0.0
      %542 = vmatprep.subr.mxu0 0.0
      %543 = vmatpush2.msra.mxu0 0.0
      %544 = vmatprep.subr.mxu0 0.0
      %545 = vmatpush2.msra.mxu0 0.0
      %546 = vmatprep.subr.mxu0 0.0
      %547 = vmatpush2.msra.mxu0 0.0
      %548 = vmatprep.subr.mxu0 0.0
      %549 = vmatpush2.msra.mxu0 0.0
      %550 = vmatprep.subr.mxu0 0.0
      %551 = vmatpush2.msra.mxu0 0.0
      %552 = vmatprep.mubr.f32.mxu0 0.0
      %553 = vmatmul.mubr.f32.gmra.mxu0 %v449
      %v554 = vpop.f32.mrf.mxu0
      %v555 = vadd.f32 %v486, %v554
      %v556 = vpop.f32.mrf.mxu0
      %557 = vmatprep.mubr.f32.mxu0 0.0
      %558 = vmatmul.mubr.f32.gmra.mxu0 %v450
      %v559 = vpop.f32.mrf.mxu0
      %v560 = vadd.f32 %v486, %v559
      %v561 = vpop.f32.mrf.mxu0
      %562 = vmatprep.mubr.f32.mxu0 0.0
      %563 = vmatmul.mubr.f32.gmra.mxu0 %v451
      %v564 = vpop.f32.mrf.mxu0
      %v565 = vadd.f32 %v486, %v564
      %v566 = vpop.f32.mrf.mxu0
      %567 = vmatprep.mubr.f32.mxu0 0.0
      %568 = vmatmul.mubr.f32.gmra.mxu0 %v452
      %v569 = vpop.f32.mrf.mxu0
      %v570 = vadd.f32 %v486, %v569
      %v571 = vpop.f32.mrf.mxu0
      %572 = vmatprep.mubr.f32.mxu0 0.0
      %573 = vmatmul.mubr.f32.gmra.mxu0 %v453
      %v574 = vpop.f32.mrf.mxu0
      %v575 = vadd.f32 %v486, %v574
      %v576 = vpop.f32.mrf.mxu0
      %577 = vmatprep.mubr.f32.mxu0 0.0
      %578 = vmatmul.mubr.f32.gmra.mxu0 %v454
      %v579 = vpop.f32.mrf.mxu0
      %v580 = vadd.f32 %v486, %v579
      %v581 = vpop.f32.mrf.mxu0
      %582 = vmatprep.mubr.f32.mxu0 0.0
      %583 = vmatmul.mubr.f32.gmra.mxu0 %v455
      %v584 = vpop.f32.mrf.mxu0
      %v585 = vadd.f32 %v486, %v584
      %v586 = vpop.f32.mrf.mxu0
      %587 = vmatprep.mubr.f32.mxu0 0.0
      %588 = vmatmul.mubr.f32.gmra.mxu0 %v456
      %v589 = vpop.f32.mrf.mxu0
      %v590 = vadd.f32 %v486, %v589
      %v591 = vpop.f32.mrf.mxu0
      %592 = vmatprep.mubr.f32.mxu0 0.0
      %593 = vmatmul.mubr.f32.gmra.mxu0 %v457
      %v594 = vpop.f32.mrf.mxu0
      %v595 = vadd.f32 %v486, %v594
      %v596 = vpop.f32.mrf.mxu0
      %597 = vmatprep.mubr.f32.mxu0 0.0
      %598 = vmatmul.mubr.f32.gmra.mxu0 %v458
      %v599 = vpop.f32.mrf.mxu0
      %v600 = vadd.f32 %v486, %v599
      %v601 = vpop.f32.mrf.mxu0
      %602 = vmatprep.mubr.f32.mxu0 0.0
      %603 = vmatmul.mubr.f32.gmra.mxu0 %v459
      %v604 = vpop.f32.mrf.mxu0
      %v605 = vadd.f32 %v486, %v604
      %v606 = vpop.f32.mrf.mxu0
      %607 = vmatprep.mubr.f32.mxu0 0.0
      %608 = vmatmul.mubr.f32.gmra.mxu0 %v460
      %v609 = vpop.f32.mrf.mxu0
      %v610 = vadd.f32 %v486, %v609
      %v611 = vpop.f32.mrf.mxu0
      %612 = vmatprep.mubr.f32.mxu0 0.0
      %613 = vmatmul.mubr.f32.gmra.mxu0 %v461
      %v614 = vpop.f32.mrf.mxu0
      %v615 = vadd.f32 %v486, %v614
      %v616 = vpop.f32.mrf.mxu0
      %617 = vmatprep.mubr.f32.mxu0 0.0
      %618 = vmatmul.mubr.f32.gmra.mxu0 %v462
      %v619 = vpop.f32.mrf.mxu0
      %v620 = vadd.f32 %v486, %v619
      %v621 = vpop.f32.mrf.mxu0
      %622 = vmatprep.mubr.f32.mxu0 0.0
      %623 = vmatmul.mubr.f32.gmra.mxu0 %v463
      %v624 = vpop.f32.mrf.mxu0
      %v625 = vadd.f32 %v486, %v624
      %v626 = vpop.f32.mrf.mxu0
      %627 = vmatprep.mubr.f32.mxu0 0.0
      %628 = vmatmul.mubr.f32.gmra.mxu0 %v464
      %v629 = vpop.f32.mrf.mxu0
      %v630 = vadd.f32 %v486, %v629
      %v631 = vpop.f32.mrf.mxu0
      %632 = vdwg.mxu0
      %v633 = vxor.u32 %v555, 2147483648
      %v634 = vxor.u32 %v560, 2147483648
      %v635 = vxor.u32 %v565, 2147483648
      %v636 = vxor.u32 %v570, 2147483648
      %v637 = vxor.u32 %v575, 2147483648
      %v638 = vxor.u32 %v580, 2147483648
      %v639 = vxor.u32 %v585, 2147483648
      %v640 = vxor.u32 %v590, 2147483648
      %v641 = vxor.u32 %v595, 2147483648
      %v642 = vxor.u32 %v600, 2147483648
      %v643 = vxor.u32 %v605, 2147483648
      %v644 = vxor.u32 %v610, 2147483648
      %v645 = vxor.u32 %v615, 2147483648
      %v646 = vxor.u32 %v620, 2147483648
      %v647 = vxor.u32 %v625, 2147483648
      %v648 = vxor.u32 %v630, 2147483648
      %v649 = vmul.f32 %v633, 1.442695
      %v650 = vpow.pop %v649
      %v651 = vmul.f32 %v634, 1.442695
      %v652 = vpow.pop %v651
      %v653 = vmul.f32 %v635, 1.442695
      %v654 = vpow.pop %v653
      %v655 = vmul.f32 %v636, 1.442695
      %v656 = vpow.pop %v655
      %v657 = vmul.f32 %v637, 1.442695
      %v658 = vpow.pop %v657
      %v659 = vmul.f32 %v638, 1.442695
      %v660 = vpow.pop %v659
      %v661 = vmul.f32 %v639, 1.442695
      %v662 = vpow.pop %v661
      %v663 = vmul.f32 %v640, 1.442695
      %v664 = vpow.pop %v663
      %v665 = vmul.f32 %v641, 1.442695
      %v666 = vpow.pop %v665
      %v667 = vmul.f32 %v642, 1.442695
      %v668 = vpow.pop %v667
      %v669 = vmul.f32 %v643, 1.442695
      %v670 = vpow.pop %v669
      %v671 = vmul.f32 %v644, 1.442695
      %v672 = vpow.pop %v671
      %v673 = vmul.f32 %v645, 1.442695
      %v674 = vpow.pop %v673
      %v675 = vmul.f32 %v646, 1.442695
      %v676 = vpow.pop %v675
      %v677 = vmul.f32 %v647, 1.442695
      %v678 = vpow.pop %v677
      %v679 = vmul.f32 %v648, 1.442695
      %v680 = vpow.pop %v679
      %v681 = vadd.f32 %v650, 1.0
      %v682 = vadd.f32 %v652, 1.0
      %v683 = vadd.f32 %v654, 1.0
      %v684 = vadd.f32 %v656, 1.0
      %v685 = vadd.f32 %v658, 1.0
      %v686 = vadd.f32 %v660, 1.0
      %v687 = vadd.f32 %v662, 1.0
      %v688 = vadd.f32 %v664, 1.0
      %v689 = vadd.f32 %v666, 1.0
      %v690 = vadd.f32 %v668, 1.0
      %v691 = vadd.f32 %v670, 1.0
      %v692 = vadd.f32 %v672, 1.0
      %v693 = vadd.f32 %v674, 1.0
      %v694 = vadd.f32 %v676, 1.0
      %v695 = vadd.f32 %v678, 1.0
      %v696 = vadd.f32 %v680, 1.0
      %v697 = vrcp.pop %v681
      %v698 = vmul.f32 1.0, %v697
      %v699 = vrcp.pop %v682
      %v700 = vmul.f32 1.0, %v699
      %v701 = vrcp.pop %v683
      %v702 = vmul.f32 1.0, %v701
      %v703 = vrcp.pop %v684
      %v704 = vmul.f32 1.0, %v703
      %v705 = vrcp.pop %v685
      %v706 = vmul.f32 1.0, %v705
      %v707 = vrcp.pop %v686
      %v708 = vmul.f32 1.0, %v707
      %v709 = vrcp.pop %v687
      %v710 = vmul.f32 1.0, %v709
      %v711 = vrcp.pop %v688
      %v712 = vmul.f32 1.0, %v711
      %v713 = vrcp.pop %v689
      %v714 = vmul.f32 1.0, %v713
      %v715 = vrcp.pop %v690
      %v716 = vmul.f32 1.0, %v715
      %v717 = vrcp.pop %v691
      %v718 = vmul.f32 1.0, %v717
      %v719 = vrcp.pop %v692
      %v720 = vmul.f32 1.0, %v719
      %v721 = vrcp.pop %v693
      %v722 = vmul.f32 1.0, %v721
      %v723 = vrcp.pop %v694
      %v724 = vmul.f32 1.0, %v723
      %v725 = vrcp.pop %v695
      %v726 = vmul.f32 1.0, %v725
      %v727 = vrcp.pop %v696
      %v728 = vmul.f32 1.0, %v727
      %vm729 = vcmask 31744
      %730 = vst.msk [vmem:[%s226] sm:$0xff] %vm729, %v698
      %731 = vst.msk [vmem:[%s226 + $0x8] sm:$0xff] %vm729, %v700
      %732 = vst.msk [vmem:[%s226 + $0x10] sm:$0xff] %vm729, %v702
      %733 = vst.msk [vmem:[%s226 + $0x18] sm:$0xff] %vm729, %v704
      %734 = vst.msk [vmem:[%s226 + $0x20] sm:$0xff] %vm729, %v706
      %735 = vst.msk [vmem:[%s226 + $0x28] sm:$0xff] %vm729, %v708
      %736 = vst.msk [vmem:[%s226 + $0x30] sm:$0xff] %vm729, %v710
      %737 = vst.msk [vmem:[%s226 + $0x38] sm:$0xff] %vm729, %v712
      %738 = vst.msk [vmem:[%s226 + $0x40] sm:$0xff] %vm729, %v714
      %739 = vst.msk [vmem:[%s226 + $0x48] sm:$0xff] %vm729, %v716
      %740 = vst.msk [vmem:[%s226 + $0x50] sm:$0xff] %vm729, %v718
      %741 = vst.msk [vmem:[%s226 + $0x58] sm:$0xff] %vm729, %v720
      %742 = vst.msk [vmem:[%s226 + $0x60] sm:$0xff] %vm729, %v722
      %743 = vst.msk [vmem:[%s226 + $0x68] sm:$0xff] %vm729, %v724
      %744 = vst.msk [vmem:[%s226 + $0x70] sm:$0xff] %vm729, %v726
      %745 = vst.msk [vmem:[%s226 + $0x78] sm:$0xff] %vm729, %v728
      %s746 = smul.u32 16, %s16
      %p747 = scmp.lt.s32.totalorder %s746, 47
      %s748 = scalar_select %p747, %s746, 47
      %s749 = smul.addr %s748, 8
      %s750 = scalar_lea.vmem %s5, %s749
      // Predicated region
      $region41: #{tpu_custom_call.1} parent=39 // pred_check
        %p751 = pneg %p144
      $region42: #{tpu_custom_call.1} parent=39 // pred_check_branch
        %753 = sbr.rel (%p751) target = $region44
      $region43: #{tpu_custom_call.1} parent=39 // pred_region
        %s754 = smul.u32 16, %s16
      $region44: #{tpu_custom_call.1} parent=39 // pred_fallthru
        _
    $region40: #{tpu_custom_call.1} parent=5 // pred_fallthru
      _
    %p755 = scmp.le.s32.totalorder 2, %s11
    // Predicated region
    $region45: #{tpu_custom_call.1} parent=5 // pred_check
      %p756 = pneg %p755
    $region46: #{tpu_custom_call.1} parent=5 // pred_check_branch
      %758 = sbr.rel (%p756) target = $region48
    $region47: #{tpu_custom_call.1} parent=5 // pred_region
      %s759 = ssub.s32 %s11, 2
      // Predicated region
      $region49: #{tpu_custom_call.1} parent=47 // pred_check
        %p760 = pneg %p150
      $region50: #{tpu_custom_call.1} parent=47 // pred_check_branch
        %762 = sbr.rel (%p760) target = $region52
      $region51: #{tpu_custom_call.1} parent=47 // pred_region
        %s763 = smul.u32 16, %s17
        %p764 = scmp.lt.s32.totalorder %s763, 47
        %s765 = scalar_select %p764, %s763, 47
        %s766 = smul.addr %s765, 8
        %s767 = scalar_lea.vmem %s5, %s766
      $region52: #{tpu_custom_call.1} parent=47 // pred_fallthru
        _
    $region48: #{tpu_custom_call.1} parent=5 // pred_fallthru
      _
  $region6: #{tpu_custom_call.1} parent=0 // loop_footer
    %s15 = sadd.s32 1, %s11
  $region7: #{tpu_custom_call.1} parent=0 // loop_footer_branch
    %10 = sbr.rel target = $region3
  $region8: #{tpu_custom_call.1} parent=0 // loop_exit
    _

</llo_original>
